<compile_context>
chip_gen: v5e
topology: v5e:2x2
jax: 0.10.0
libtpu: 0.0.40
codegen_flags: <defaults>
</compile_context>

<pallas_src>
import jax
import jax.numpy as jnp
from jax.experimental import pallas as pl
from jax.experimental.pallas import tpu as pltpu

TOTAL_NODE = 16    # original module uses 104; small synthetic size here
N_IN = 4
N_OUT = 8
N_LINK = 512
BATCH = 2
LINK_TILE = 512    # 512 is safe on v5e/v6e/v7x at TOTAL_NODE=104 (22 MiB dbuf);
                   # raise to 1024 on v6e with a larger vmem limit if desired.
VMEM_LIMIT_BYTES = 48 * 1024 * 1024   # explicit scoped-VMEM limit, v7x-safe


def _ave_d_loss_kernel(loads2_ref, lodm_ref, link_ref,
                       inv_caps_ref, w_ref, dps_ref,
                       out_ref, acc_ref):
    """One grid step processes one (TT_pad, link_tile) slab of Link_mtx."""
    step = pl.program_id(1)

    @pl.when(step == 0)
    def _init():
        acc_ref[...] = jnp.zeros_like(acc_ref)

    link = link_ref[...].astype(jnp.float32)              # (TT_pad, tl), bf16->f32

    # raw per-link load and demand-weight projection, both in the MXU-native
    # (B, TT_pad) x (TT_pad, tl) orientation -- no slab transpose, no big RMW.
    link_load = jnp.dot(loads2_ref[...], link,
                        preferred_element_type=jnp.float32)      # (B, tl)
    proj = jnp.dot(lodm_ref[...], link,
                   preferred_element_type=jnp.float32)           # (B, tl)

    # (Caps - load) / Caps  ==  1 - load * (1/Caps)
    link_ut = 1.0 - link_load * inv_caps_ref[...]
    link_ut = jnp.where(link_ut < 0.0, -1.0, link_ut)

    delays = w_ref[...] / link_ut                                # exact divide
    delays = jnp.where(delays < 0.0, 1000.0, delays)
    delays = delays + dps_ref[...]

    # weighted-average contribution reduced directly in link space.  proj == 0
    # marks links not used by any in-block demand (including padded links), so
    # they contribute exactly 0 even if their delay is huge/inf.
    contrib = jnp.where(proj > 0.0, delays * proj, 0.0)
    acc_ref[...] += jnp.sum(contrib, axis=1, keepdims=True)      # (B, 1)

    @pl.when(step == pl.num_programs(1) - 1)
    def _finalize():
        out_ref[...] = acc_ref[...][None]                        # (1, B, 1)


def prepare_link_constants(link_mtx, caps, weights, delay_ps, *,
                           total_node=TOTAL_NODE, link_tile=LINK_TILE,
                           n_split=1):
    """Pad/cast the static (per-topology) operands ONCE, reused across calls.

    The link matrix is cast to bf16 BEFORE padding (exact for a 0/1
    connectivity matrix) so no full-size f32 copy is ever materialized.
    """
    f32, bf16 = jnp.float32, jnp.bfloat16
    TT = total_node * total_node
    TT_pad = pl.cdiv(TT, 128) * 128
    L = link_mtx.shape[1]
    chunk = link_tile * n_split
    L_pad = pl.cdiv(L, chunk) * chunk
    pad_tt, pad_l = TT_pad - TT, L_pad - L

    link = jnp.pad(link_mtx.astype(bf16), ((0, pad_tt), (0, pad_l)))
    # padded links: 1/cap = 1, weight = 0, delay_ps = 0 -> delay 0, proj 0
    inv_caps = jnp.pad(1.0 / caps.astype(f32), (0, pad_l),
                       constant_values=1.0).reshape(1, L_pad)
    w = jnp.pad(weights.astype(f32), (0, pad_l)).reshape(1, L_pad)
    dps = jnp.pad(delay_ps.astype(f32), (0, pad_l)).reshape(1, L_pad)

    return dict(link=link, inv_caps=inv_caps, w=w, dps=dps,
                TT_pad=TT_pad, L_pad=L_pad,
                link_tile=link_tile, n_split=n_split, total_node=total_node)


def ave_d_loss_batch(in_x, load_mtx, loads_all_t, consts, *,
                     n_in=N_IN, n_out=N_OUT):
    f32 = jnp.float32
    B = in_x.shape[0]
    T = consts["total_node"]
    TT = T * T
    TT_pad = consts["TT_pad"]
    L_pad = consts["L_pad"]
    link_tile = consts["link_tile"]
    n_split = consts["n_split"]
    n_steps = L_pad // (link_tile * n_split)
    pad_tt = TT_pad - TT

    # --- x_final: trivial elementwise product, returned directly (XLA fuses) ---
    x_final = in_x.astype(f32) * load_mtx.astype(f32)[None]     # (B, n_in, n_out)

    # --- embed the (n_in, n_out) block into the flattened T*T vector ---
    mask2d = jnp.zeros((T, T), f32).at[0:n_in, n_in:n_in + n_out].set(1.0)
    x_pad = jnp.zeros((B, T, T), f32).at[:, 0:n_in, n_in:n_in + n_out].set(x_final)

    base = loads_all_t.astype(f32) * (1.0 - mask2d)             # demand block zeroed
    loads2 = (base[None] + x_pad).reshape(B, TT)                # (B, TT) f32

    total = jnp.sum(x_final, axis=(1, 2)).reshape(B, 1, 1)
    # lod pre-masked: zero outside the demand block, so no separate mask input
    lod_masked = (x_pad / total).reshape(B, TT)                 # (B, TT) f32

    # lane-dense padding of the flattened node-pair axis (zeros are inert)
    loads2 = jnp.pad(loads2, ((0, 0), (0, pad_tt)))             # stays f32
    lod_masked = jnp.pad(lod_masked, ((0, 0), (0, pad_tt)))

    partials = pl.pallas_call(
        _ave_d_loss_kernel,
        out_shape=jax.ShapeDtypeStruct((n_split, B, 1), f32),
        grid_spec=pltpu.PrefetchScalarGridSpec(
            num_scalar_prefetch=0,
            grid=(n_split, n_steps),
            in_specs=[
                pl.BlockSpec((B, TT_pad), lambda c, l: (0, 0)),    # loads2 (resident)
                pl.BlockSpec((B, TT_pad), lambda c, l: (0, 0)),    # lod_masked (resident)
                pl.BlockSpec((TT_pad, link_tile),
                             lambda c, l: (0, c * n_steps + l)),   # link slab (streamed)
                pl.BlockSpec((1, link_tile),
                             lambda c, l: (0, c * n_steps + l)),   # 1/Caps
                pl.BlockSpec((1, link_tile),
                             lambda c, l: (0, c * n_steps + l)),   # weights
                pl.BlockSpec((1, link_tile),
                             lambda c, l: (0, c * n_steps + l)),   # delay_ps
            ],
            out_specs=pl.BlockSpec((1, B, 1), lambda c, l: (c, 0, 0)),
            scratch_shapes=[pltpu.VMEM((B, 1), jnp.float32)],
        ),
        compiler_params=pltpu.CompilerParams(
            dimension_semantics=("parallel", "arbitrary"),
            vmem_limit_bytes=VMEM_LIMIT_BYTES),
    )(loads2, lod_masked, consts["link"], consts["inv_caps"],
      consts["w"], consts["dps"])

    ave = jnp.sum(partials[:, :, 0], axis=0)                    # combine per-core partials
    return x_final, ave


def reference(in_x, load_mtx, loads_all_t, link_mtx, caps, weights, delay_ps,
              *, n_in=N_IN, n_out=N_OUT, total_node=TOTAL_NODE):
    """Pure-JAX transcription of the PyTorch forward (for verification)."""
    B = in_x.shape[0]
    x_final = in_x * load_mtx[None]
    la2 = jnp.broadcast_to(loads_all_t[None], (B, total_node, total_node))
    la2 = la2.at[:, 0:n_in, n_in:n_in + n_out].set(x_final)
    link_ut = la2.reshape(B, -1) @ link_mtx
    link_ut = (caps[None] - link_ut) / caps[None]
    link_ut = jnp.where(link_ut < 0.0, -1.0, link_ut)
    delays = weights[None] / link_ut
    delays = jnp.where(delays < 0.0, 1000.0, delays)
    delays = delays + delay_ps[None]
    delays = delays @ link_mtx.T
    delays = delays.reshape(B, total_node, total_node)[:, 0:n_in, n_in:n_in + n_out]
    lod_cp = x_final / jnp.sum(x_final, axis=(1, 2), keepdims=True)
    ave = jnp.sum(delays * lod_cp, axis=(1, 2))
    return x_final, ave


if __name__ == "__main__":
    key = jax.random.PRNGKey(0)
    k = jax.random.split(key, 8)

    in_x = jax.random.uniform(k[0], (BATCH, N_IN, N_OUT), jnp.float32)
    loads = jax.random.uniform(k[1], (N_OUT,), jnp.float32, 0.5, 1.5)
    load_mtx = jnp.tile(loads[None, :], (N_IN, 1))            # loads.repeat([N_in, 1])
    loads_all_t = jax.random.uniform(k[2], (TOTAL_NODE, TOTAL_NODE), jnp.float32, 0.0, 1.0)
    link_mtx = (jax.random.uniform(k[3], (TOTAL_NODE * TOTAL_NODE, N_LINK)) < 0.2).astype(jnp.float32)
    caps = jax.random.uniform(k[4], (N_LINK,), jnp.float32, 200.0, 300.0)
    weights = jax.random.uniform(k[5], (N_LINK,), jnp.float32, 1.0, 2.0)
    delay_ps = jax.random.uniform(k[6], (N_LINK,), jnp.float32, 0.01, 0.1)

    x_ref, ave_ref = reference(in_x, load_mtx, loads_all_t, link_mtx,
                               caps, weights, delay_ps)

    # ---- default config: 512-wide tile covers all links -> single grid step ----
    consts = prepare_link_constants(link_mtx, caps, weights, delay_ps)
    x_final, ave_delay = ave_d_loss_batch(in_x, load_mtx, loads_all_t, consts)
    jax.block_until_ready((x_final, ave_delay))

    assert x_final.shape == (BATCH, N_IN, N_OUT)
    assert ave_delay.shape == (BATCH,)
    assert bool(jnp.allclose(x_final, x_ref, rtol=1e-5, atol=1e-5))
    assert bool(jnp.allclose(ave_delay, ave_ref, rtol=2e-2, atol=2e-2))

    # ---- multi-tile + 2-way split config: exercises the accumulation path and
    #      the v7x two-TensorCore link-stream split (runs sequentially on 1-TC) ----
    consts2 = prepare_link_constants(link_mtx, caps, weights, delay_ps,
                                     link_tile=128, n_split=2)
    _, ave_delay2 = ave_d_loss_batch(in_x, load_mtx, loads_all_t, consts2)
    jax.block_until_ready(ave_delay2)
    assert bool(jnp.allclose(ave_delay2, ave_ref, rtol=2e-2, atol=2e-2))

    print("KERNEL_OK")
</pallas_src>

<mosaic_0001>
module attributes {stable_mosaic.version = 11 : i64} {
  func.func @_ave_d_loss_kernel(%arg0: i32, %arg1: i32, %arg2: memref<2x256xf32, #tpu.memory_space<vmem>>, %arg3: memref<2x256xf32, #tpu.memory_space<vmem>>, %arg4: memref<256x512xbf16, #tpu.memory_space<vmem>>, %arg5: memref<1x512xf32, #tpu.memory_space<vmem>>, %arg6: memref<1x512xf32, #tpu.memory_space<vmem>>, %arg7: memref<1x512xf32, #tpu.memory_space<vmem>>, %arg8: memref<1x2x1xf32, #tpu.memory_space<vmem>>, %arg9: memref<2x1xf32, #tpu.memory_space<vmem>>) attributes {dimension_semantics = [#tpu.dimension_semantics<parallel>, #tpu.dimension_semantics<arbitrary>], iteration_bounds = array<i64: 1, 1>, scalar_prefetch = 0 : i64, scratch_operands = 1 : i64, tpu.core_type = #tpu.core_type<tc>, window_params = [{pipeline_mode = #tpu.pipeline_mode<synchronous>, transform_indices = @transform_0, window_bounds = array<i64: 2, 256>}, {pipeline_mode = #tpu.pipeline_mode<synchronous>, transform_indices = @transform_1, window_bounds = array<i64: 2, 256>}, {transform_indices = @transform_2, window_bounds = array<i64: 256, 512>}, {transform_indices = @transform_3, window_bounds = array<i64: 1, 512>}, {transform_indices = @transform_4, window_bounds = array<i64: 1, 512>}, {transform_indices = @transform_5, window_bounds = array<i64: 1, 512>}, {transform_indices = @transform_6, window_bounds = array<i64: 1, 2, 1>}]} {
    %c0_i32 = arith.constant 0 : i32
    %0 = arith.cmpi eq, %arg1, %c0_i32 : i32
    %1 = arith.extui %0 : i1 to i32
    %c0_i32_0 = arith.constant 0 : i32
    %2 = arith.cmpi ne, %1, %c0_i32_0 : i32
    scf.if %2 {
      %cst_27 = arith.constant 0.000000e+00 : f32
      %41 = vector.broadcast %cst_27 : f32 to vector<2x1xf32>
      %c0_28 = arith.constant 0 : index
      %c0_29 = arith.constant 0 : index
      %42 = vector.load %arg9[%c0_28, %c0_29] : memref<2x1xf32, #tpu.memory_space<vmem>>, vector<2x1xf32>
      tpu.vector_store %arg9[%c0_28, %c0_29], %41 {strides = array<i32>} : memref<2x1xf32, #tpu.memory_space<vmem>>, vector<2x1xf32>,
    } else {
    }
    %c0 = arith.constant 0 : index
    %c0_1 = arith.constant 0 : index
    %3 = vector.load %arg4[%c0, %c0_1] : memref<256x512xbf16, #tpu.memory_space<vmem>>, vector<256x512xbf16>
    %4 = arith.extf %3 : vector<256x512xbf16> to vector<256x512xf32>
    %c0_2 = arith.constant 0 : index
    %c0_3 = arith.constant 0 : index
    %5 = vector.load %arg2[%c0_2, %c0_3] : memref<2x256xf32, #tpu.memory_space<vmem>>, vector<2x256xf32>
    %cst = arith.constant dense<0.000000e+00> : vector<2x512xf32>
    %6 = tpu.matmul %5, %4, %cst {dimension_numbers = #tpu.dot_dimension_numbers<[1], [0], [0], [1], [0, 0, 1, 1], [], []>} : vector<2x256xf32>, vector<256x512xf32>, vector<2x512xf32> -> vector<2x512xf32>
    %c0_4 = arith.constant 0 : index
    %c0_5 = arith.constant 0 : index
    %7 = vector.load %arg3[%c0_4, %c0_5] : memref<2x256xf32, #tpu.memory_space<vmem>>, vector<2x256xf32>
    %cst_6 = arith.constant dense<0.000000e+00> : vector<2x512xf32>
    %8 = tpu.matmul %7, %4, %cst_6 {dimension_numbers = #tpu.dot_dimension_numbers<[1], [0], [0], [1], [0, 0, 1, 1], [], []>} : vector<2x256xf32>, vector<256x512xf32>, vector<2x512xf32> -> vector<2x512xf32>
    %c0_7 = arith.constant 0 : index
    %c0_8 = arith.constant 0 : index
    %9 = vector.load %arg5[%c0_7, %c0_8] : memref<1x512xf32, #tpu.memory_space<vmem>>, vector<1x512xf32>
    %10 = vector.broadcast %9 : vector<1x512xf32> to vector<2x512xf32>
    %11 = arith.mulf %6, %10 : vector<2x512xf32>
    %cst_9 = arith.constant 1.000000e+00 : f32
    %12 = vector.broadcast %cst_9 : f32 to vector<2x512xf32>
    %13 = arith.subf %12, %11 : vector<2x512xf32>
    %cst_10 = arith.constant 0.000000e+00 : f32
    %14 = vector.broadcast %cst_10 : f32 to vector<2x512xf32>
    %15 = arith.cmpf olt, %13, %14 : vector<2x512xf32>
    %cst_11 = arith.constant -1.000000e+00 : f32
    %16 = vector.broadcast %cst_11 : f32 to vector<2x512xf32>
    %17 = arith.select %15, %16, %13 : vector<2x512xi1>, vector<2x512xf32>
    %c0_12 = arith.constant 0 : index
    %c0_13 = arith.constant 0 : index
    %18 = vector.load %arg6[%c0_12, %c0_13] : memref<1x512xf32, #tpu.memory_space<vmem>>, vector<1x512xf32>
    %19 = vector.broadcast %18 : vector<1x512xf32> to vector<2x512xf32>
    %20 = arith.divf %19, %17 : vector<2x512xf32>
    %cst_14 = arith.constant 0.000000e+00 : f32
    %21 = vector.broadcast %cst_14 : f32 to vector<2x512xf32>
    %22 = arith.cmpf olt, %20, %21 : vector<2x512xf32>
    %cst_15 = arith.constant 1.000000e+03 : f32
    %23 = vector.broadcast %cst_15 : f32 to vector<2x512xf32>
    %24 = arith.select %22, %23, %20 : vector<2x512xi1>, vector<2x512xf32>
    %c0_16 = arith.constant 0 : index
    %c0_17 = arith.constant 0 : index
    %25 = vector.load %arg7[%c0_16, %c0_17] : memref<1x512xf32, #tpu.memory_space<vmem>>, vector<1x512xf32>
    %26 = vector.broadcast %25 : vector<1x512xf32> to vector<2x512xf32>
    %27 = arith.addf %24, %26 : vector<2x512xf32>
    %cst_18 = arith.constant 0.000000e+00 : f32
    %28 = vector.broadcast %cst_18 : f32 to vector<2x512xf32>
    %29 = arith.cmpf ogt, %8, %28 : vector<2x512xf32>
    %30 = arith.mulf %27, %8 : vector<2x512xf32>
    %cst_19 = arith.constant 0.000000e+00 : f32
    %31 = vector.broadcast %cst_19 : f32 to vector<2x512xf32>
    %32 = arith.select %29, %30, %31 : vector<2x512xi1>, vector<2x512xf32>
    %c0_20 = arith.constant 0 : index
    %c0_21 = arith.constant 0 : index
    %33 = vector.load %arg9[%c0_20, %c0_21] : memref<2x1xf32, #tpu.memory_space<vmem>>, vector<2x1xf32>
    %cst_22 = arith.constant dense<0.000000e+00> : vector<2xf32>
    %34 = vector.multi_reduction <add>, %32, %cst_22 [1] : vector<2x512xf32> to vector<2xf32>
    %35 = vector.shape_cast %34 : vector<2xf32> to vector<2x1xf32>
    %36 = arith.addf %33, %35 : vector<2x1xf32>
    %c0_23 = arith.constant 0 : index
    %c0_24 = arith.constant 0 : index
    %37 = vector.load %arg9[%c0_23, %c0_24] : memref<2x1xf32, #tpu.memory_space<vmem>>, vector<2x1xf32>
    tpu.vector_store %arg9[%c0_23, %c0_24], %36 {strides = array<i32>} : memref<2x1xf32, #tpu.memory_space<vmem>>, vector<2x1xf32>,
    %c0_i32_25 = arith.constant 0 : i32
    %38 = arith.cmpi eq, %arg1, %c0_i32_25 : i32
    %39 = arith.extui %38 : i1 to i32
    %c0_i32_26 = arith.constant 0 : i32
    %40 = arith.cmpi ne, %39, %c0_i32_26 : i32
    scf.if %40 {
      %c0_27 = arith.constant 0 : index
      %c0_28 = arith.constant 0 : index
      %41 = vector.load %arg9[%c0_27, %c0_28] : memref<2x1xf32, #tpu.memory_space<vmem>>, vector<2x1xf32>
      %42 = vector.shape_cast %41 : vector<2x1xf32> to vector<1x2x1xf32>
      %c0_29 = arith.constant 0 : index
      %c0_30 = arith.constant 0 : index
      %c0_31 = arith.constant 0 : index
      %43 = vector.load %arg8[%c0_29, %c0_30, %c0_31] : memref<1x2x1xf32, #tpu.memory_space<vmem>>, vector<1x2x1xf32>
      tpu.vector_store %arg8[%c0_29, %c0_30, %c0_31], %42 {strides = array<i32>} : memref<1x2x1xf32, #tpu.memory_space<vmem>>, vector<1x2x1xf32>,
    } else {
    }
    return
  }
  func.func @transform_0(%arg0: i32, %arg1: i32) -> (i32, i32) {
    %c0_i32 = arith.constant 0 : i32
    %c0_i32_0 = arith.constant 0 : i32
    %c0_i32_1 = arith.constant 0 : i32
    return %c0_i32, %c0_i32_0 : i32, i32
  }
  func.func @transform_1(%arg0: i32, %arg1: i32) -> (i32, i32) {
    %c0_i32 = arith.constant 0 : i32
    %c0_i32_0 = arith.constant 0 : i32
    %c0_i32_1 = arith.constant 0 : i32
    return %c0_i32, %c0_i32_0 : i32, i32
  }
  func.func @transform_2(%arg0: i32, %arg1: i32) -> (i32, i32) {
    %c1_i32 = arith.constant 1 : i32
    %0 = arith.muli %arg0, %c1_i32 : i32
    %1 = arith.addi %0, %arg1 : i32
    %c0_i32 = arith.constant 0 : i32
    %c0_i32_0 = arith.constant 0 : i32
    return %c0_i32, %1 : i32, i32
  }
  func.func @transform_3(%arg0: i32, %arg1: i32) -> (i32, i32) {
    %c1_i32 = arith.constant 1 : i32
    %0 = arith.muli %arg0, %c1_i32 : i32
    %1 = arith.addi %0, %arg1 : i32
    %c0_i32 = arith.constant 0 : i32
    %c0_i32_0 = arith.constant 0 : i32
    return %c0_i32, %1 : i32, i32
  }
  func.func @transform_4(%arg0: i32, %arg1: i32) -> (i32, i32) {
    %c1_i32 = arith.constant 1 : i32
    %0 = arith.muli %arg0, %c1_i32 : i32
    %1 = arith.addi %0, %arg1 : i32
    %c0_i32 = arith.constant 0 : i32
    %c0_i32_0 = arith.constant 0 : i32
    return %c0_i32, %1 : i32, i32
  }
  func.func @transform_5(%arg0: i32, %arg1: i32) -> (i32, i32) {
    %c1_i32 = arith.constant 1 : i32
    %0 = arith.muli %arg0, %c1_i32 : i32
    %1 = arith.addi %0, %arg1 : i32
    %c0_i32 = arith.constant 0 : i32
    %c0_i32_0 = arith.constant 0 : i32
    return %c0_i32, %1 : i32, i32
  }
  func.func @transform_6(%arg0: i32, %arg1: i32) -> (i32, i32, i32) {
    %c0_i32 = arith.constant 0 : i32
    %c0_i32_0 = arith.constant 0 : i32
    %c0_i32_1 = arith.constant 0 : i32
    return %arg0, %c0_i32, %c0_i32_0 : i32, i32, i32
  }
}

</mosaic_0001>

<llo_original>
// kernel: tpu_custom_call.1
$region0: #{tpu_custom_call.1}
  #allocation0 [shape = 'u32[]', space=smem, size = 0x4, offset = 0x4, fixed_abs, tag = 'smem constant byte address 0x4 - core index']
  #allocation1 [shape = 'u32[72,128]{1,0:T(1,128)}', space=vmem, size = 0x9000, scoped, tag = 'internal scratch']
  #allocation2 [shape = 'f32[2,1]{1,0:T(2,128)}', space=vmem, size = 0x400, scoped, tag = 'scratch operand']
  %s0 = inlined_call_operand.hbm [shape: f32[2,256], index: 0, kind: input, shape index: {}]
  %s1 = inlined_call_operand.hbm [shape: f32[2,256], index: 1, kind: input, shape index: {}]
  %s2 = inlined_call_operand.hbm [shape: bf16[256,512], index: 2, kind: input, shape index: {}]
  %s3 = inlined_call_operand.hbm [shape: f32[1,512], index: 3, kind: input, shape index: {}]
  %s4 = inlined_call_operand.hbm [shape: f32[1,512], index: 4, kind: input, shape index: {}]
  %s5 = inlined_call_operand.vmem [shape: f32[1,512], index: 5, kind: input, shape index: {}]
  %s6 = inlined_call_operand.vmem [shape: f32[1,2,1], index: 6, kind: output, shape index: {}]
  %s7 = sld [smem:[#allocation0]]
  $region62: #{tpu_custom_call.1} parent=0
    _
  %s9 = ssub.s32 1, %s7
  %s10 = scalar_select 0, %s9, %s7
  $region1: #{tpu_custom_call.1} parent=0
    #allocation3 [shape = 'u8[2048]{0}', space=vmem, size = 0x800, scoped, tag = 'input window, operand 0, single buffered']
    #allocation4 [shape = 's32[1]{0}', space=sflag, size = 0x4, scoped, tag = 'scoped memory for tpu_custom_call.1']
    #allocation5 [shape = 'u8[2048]{0}', space=vmem, size = 0x800, scoped, tag = 'input window, operand 1, single buffered']
    #allocation6 [shape = 's32[1]{0}', space=sflag, size = 0x4, scoped, tag = 'scoped memory for tpu_custom_call.1']
    #allocation7 [shape = 'u8[262144]{0}', space=vmem, size = 0x40000, scoped, tag = 'input window, operand 2, single buffered']
    #allocation8 [shape = 'u8[2048]{0}', space=vmem, size = 0x800, scoped, tag = 'input window, operand 3, single buffered']
    #allocation9 [shape = 's32[1]{0}', space=sflag, size = 0x4, scoped, tag = 'scoped memory for tpu_custom_call.1']
    #allocation10 [shape = 'u8[2048]{0}', space=vmem, size = 0x800, scoped, tag = 'input window, operand 4, single buffered']
    %11 = vsyncpa [#allocation4], 0
    %12 = vsyncpa [#allocation6], 0
    %13 = vsyncpa [#allocation9], 0
    // Predicated region
    $region2: #{tpu_custom_call.1} parent=1 // pred_check
      _
    $region3: #{tpu_custom_call.1} parent=1 // pred_check_branch
      %15 = sbr.rel (0) target = $region5
    $region4: #{tpu_custom_call.1} parent=1 // pred_region
      %17 = vsyncadd [#allocation4], 0
      %s19 = sshll.u32 %s0, 4
      %s20 = int_to_ptr.hbm [resolvable:$true] %s19
      %s21 = sshll.u32 [#allocation3], 4
      %s22 = int_to_ptr.vmem [resolvable:$true] %s21
      %24 = dma.hbm_to_vmem [thread:$0]  %s20, 64, %s22, [#allocation4]
    $region5: #{tpu_custom_call.1} parent=1 // pred_fallthru
      _
    // Predicated region
    $region6: #{tpu_custom_call.1} parent=1 // pred_check
      _
    $region7: #{tpu_custom_call.1} parent=1 // pred_check_branch
      %26 = sbr.rel (0) target = $region9
    $region8: #{tpu_custom_call.1} parent=1 // pred_region
      %28 = vsyncadd [#allocation6], 0
      %s30 = sshll.u32 %s1, 4
      %s31 = int_to_ptr.hbm [resolvable:$true] %s30
      %s32 = sshll.u32 [#allocation5], 4
      %s33 = int_to_ptr.vmem [resolvable:$true] %s32
      %35 = dma.hbm_to_vmem [thread:$0]  %s31, 64, %s33, [#allocation6]
    $region9: #{tpu_custom_call.1} parent=1 // pred_fallthru
      _
    // Predicated region
    $region10: #{tpu_custom_call.1} parent=1 // pred_check
      _
    $region11: #{tpu_custom_call.1} parent=1 // pred_check_branch
      %37 = sbr.rel (0) target = $region13
    $region12: #{tpu_custom_call.1} parent=1 // pred_region
      %s38 = sadd.s32 0, 0
      %s39 = smul.u32 4, %s38
      %41 = vsyncadd [#allocation6], 0
      %s42 = smul.addr %s39, 4
      %s43 = scalar_lea.hbm %s2, %s42
      %s44 = sshll.u32 %s43, 4
      %s45 = int_to_ptr.hbm [resolvable:$true] %s44
      %s46 = sshll.u32 [#allocation7], 4
      %s47 = int_to_ptr.vmem [resolvable:$true] %s46
      %52 = dma.hbm_to_vmem [thread:$0]  %s45, 8192, %s47, [#allocation6], 256, 256, 16
    $region13: #{tpu_custom_call.1} parent=1 // pred_fallthru
      _
    // Predicated region
    $region14: #{tpu_custom_call.1} parent=1 // pred_check
      _
    $region15: #{tpu_custom_call.1} parent=1 // pred_check_branch
      %54 = sbr.rel (0) target = $region17
    $region16: #{tpu_custom_call.1} parent=1 // pred_region
      %s55 = sadd.s32 0, 0
      %s56 = smul.u32 4, %s55
      %58 = vsyncadd [#allocation9], 0
      %s59 = scalar_lea.hbm %s3, %s56
      %s61 = sshll.u32 %s59, 4
      %s62 = int_to_ptr.hbm [resolvable:$true] %s61
      %s63 = sshll.u32 [#allocation8], 4
      %s64 = int_to_ptr.vmem [resolvable:$true] %s63
      %66 = dma.hbm_to_vmem [thread:$0]  %s62, 64, %s64, [#allocation9]
    $region17: #{tpu_custom_call.1} parent=1 // pred_fallthru
      _
    // Predicated region
    $region18: #{tpu_custom_call.1} parent=1 // pred_check
      _
    $region19: #{tpu_custom_call.1} parent=1 // pred_check_branch
      %68 = sbr.rel (0) target = $region21
    $region20: #{tpu_custom_call.1} parent=1 // pred_region
      %s69 = sadd.s32 0, 0
      %s70 = smul.u32 4, %s69
      %72 = vsyncadd [#allocation9], 0
      %s73 = scalar_lea.hbm %s4, %s70
      %s75 = sshll.u32 %s73, 4
      %s76 = int_to_ptr.hbm [resolvable:$true] %s75
      %s77 = sshll.u32 [#allocation10], 4
      %s78 = int_to_ptr.vmem [resolvable:$true] %s77
      %80 = dma.hbm_to_vmem [thread:$0]  %s76, 64, %s78, [#allocation9]
    $region21: #{tpu_custom_call.1} parent=1 // pred_fallthru
      _
    // Predicated region
    $region22: #{tpu_custom_call.1} parent=1 // pred_check
      _
    $region23: #{tpu_custom_call.1} parent=1 // pred_check_branch
      %82 = sbr.rel (0) target = $region25
    $region24: #{tpu_custom_call.1} parent=1 // pred_region
      %s83 = sadd.s32 0, 0
      %s84 = smul.u32 4, %s83
      %p85 = scmp.lt.s32.totalorder %s84, 3
      %s86 = scalar_select %p85, %s84, 3
      %s87 = scalar_lea.vmem %s5, %s86
      %s88 = sadd.s32 0, 0
      %s89 = smul.u32 4, %s88
    $region25: #{tpu_custom_call.1} parent=1 // pred_fallthru
      _
    // Predicated region
    $region26: #{tpu_custom_call.1} parent=1 // pred_check
      _
    $region27: #{tpu_custom_call.1} parent=1 // pred_check_branch
      %91 = sbr.rel (0) target = $region29
    $region28: #{tpu_custom_call.1} parent=1 // pred_region
      %93 = dma.done [#allocation4], 64
    $region29: #{tpu_custom_call.1} parent=1 // pred_fallthru
      _
    // Predicated region
    $region30: #{tpu_custom_call.1} parent=1 // pred_check
      _
    $region31: #{tpu_custom_call.1} parent=1 // pred_check_branch
      %95 = sbr.rel (0) target = $region33
    $region32: #{tpu_custom_call.1} parent=1 // pred_region
      %97 = dma.done [#allocation6], 64
    $region33: #{tpu_custom_call.1} parent=1 // pred_fallthru
      _
    // Predicated region
    $region34: #{tpu_custom_call.1} parent=1 // pred_check
      _
    $region35: #{tpu_custom_call.1} parent=1 // pred_check_branch
      %99 = sbr.rel (0) target = $region37
    $region36: #{tpu_custom_call.1} parent=1 // pred_region
      %101 = dma.done [#allocation6], 8192
    $region37: #{tpu_custom_call.1} parent=1 // pred_fallthru
      _
    // Predicated region
    $region38: #{tpu_custom_call.1} parent=1 // pred_check
      _
    $region39: #{tpu_custom_call.1} parent=1 // pred_check_branch
      %103 = sbr.rel (0) target = $region41
    $region40: #{tpu_custom_call.1} parent=1 // pred_region
      %105 = dma.done [#allocation9], 64
    $region41: #{tpu_custom_call.1} parent=1 // pred_fallthru
      _
    // Predicated region
    $region42: #{tpu_custom_call.1} parent=1 // pred_check
      _
    $region43: #{tpu_custom_call.1} parent=1 // pred_check_branch
      %107 = sbr.rel (0) target = $region45
    $region44: #{tpu_custom_call.1} parent=1 // pred_region
      %109 = dma.done [#allocation9], 64
    $region45: #{tpu_custom_call.1} parent=1 // pred_fallthru
      _
    %s110 = sadd.s32 0, 0
    %s111 = smul.u32 4, %s110
    %p112 = scmp.lt.s32.totalorder %s111, 3
    %s113 = scalar_select %p112, %s111, 3
    %s114 = scalar_lea.vmem %s5, %s113
    %s115 = sadd.s32 0, 0
    %s116 = smul.u32 4, %s115
    %s117 = sadd.s32 0, 0
    %s118 = smul.u32 4, %s117
    %s119 = sadd.s32 0, 0
    %s120 = smul.u32 4, %s119
    %s121 = sadd.s32 0, 0
    %s122 = smul.u32 4, %s121
    %p123 = scmp.lt.s32.totalorder %s122, 3
    %s124 = scalar_select %p123, %s122, 3
    %s125 = scalar_lea.vmem %s5, %s124
    %s126 = sadd.s32 0, 0
    %s127 = smul.u32 4, %s126
    %p128 = scmp.eq.s32.totalorder 0, 0
    // Predicated region
    $region46: #{tpu_custom_call.1} parent=1 // pred_check
      %p129 = pneg %p128
    $region47: #{tpu_custom_call.1} parent=1 // pred_check_branch
      %131 = sbr.rel (%p129) target = $region49
    $region48: #{tpu_custom_call.1} parent=1 // pred_region
      %vm132 = vcmask 1024
      %133 = vst.msk [vmem:[#allocation2] sm:$0x3] %vm132, 0.0
    $region49: #{tpu_custom_call.1} parent=1 // pred_fallthru
      _
    %v134 = vld [vmem:[#allocation7] sm:$0xff]
    %v135 = vld [vmem:[#allocation7 + $0x8] sm:$0xff]
    %v136 = vld [vmem:[#allocation7 + $0x10] sm:$0xff]
    %v137 = vld [vmem:[#allocation7 + $0x18] sm:$0xff]
    %v138 = vld [vmem:[#allocation7 + $0x20] sm:$0xff]
    %v139 = vld [vmem:[#allocation7 + $0x28] sm:$0xff]
    %v140 = vld [vmem:[#allocation7 + $0x30] sm:$0xff]
    %v141 = vld [vmem:[#allocation7 + $0x38] sm:$0xff]
    %v142 = vld [vmem:[#allocation7 + $0x40] sm:$0xff]
    %v143 = vld [vmem:[#allocation7 + $0x48] sm:$0xff]
    %v144 = vld [vmem:[#allocation7 + $0x50] sm:$0xff]
    %v145 = vld [vmem:[#allocation7 + $0x58] sm:$0xff]
    %v146 = vld [vmem:[#allocation7 + $0x60] sm:$0xff]
    %v147 = vld [vmem:[#allocation7 + $0x68] sm:$0xff]
    %v148 = vld [vmem:[#allocation7 + $0x70] sm:$0xff]
    %v149 = vld [vmem:[#allocation7 + $0x78] sm:$0xff]
    %v150 = vld [vmem:[#allocation7 + $0x80] sm:$0xff]
    %v151 = vld [vmem:[#allocation7 + $0x88] sm:$0xff]
    %v152 = vld [vmem:[#allocation7 + $0x90] sm:$0xff]
    %v153 = vld [vmem:[#allocation7 + $0x98] sm:$0xff]
    %v154 = vld [vmem:[#allocation7 + $0xa0] sm:$0xff]
    %v155 = vld [vmem:[#allocation7 + $0xa8] sm:$0xff]
    %v156 = vld [vmem:[#allocation7 + $0xb0] sm:$0xff]
    %v157 = vld [vmem:[#allocation7 + $0xb8] sm:$0xff]
    %v158 = vld [vmem:[#allocation7 + $0xc0] sm:$0xff]
    %v159 = vld [vmem:[#allocation7 + $0xc8] sm:$0xff]
    %v160 = vld [vmem:[#allocation7 + $0xd0] sm:$0xff]
    %v161 = vld [vmem:[#allocation7 + $0xd8] sm:$0xff]
    %v162 = vld [vmem:[#allocation7 + $0xe0] sm:$0xff]
    %v163 = vld [vmem:[#allocation7 + $0xe8] sm:$0xff]
    %v164 = vld [vmem:[#allocation7 + $0xf0] sm:$0xff]
    %v165 = vld [vmem:[#allocation7 + $0xf8] sm:$0xff]
    %v166 = vld [vmem:[#allocation7 + $0x100] sm:$0xff]
    %v167 = vld [vmem:[#allocation7 + $0x108] sm:$0xff]
    %v168 = vld [vmem:[#allocation7 + $0x110] sm:$0xff]
    %v169 = vld [vmem:[#allocation7 + $0x118] sm:$0xff]
    %v170 = vld [vmem:[#allocation7 + $0x120] sm:$0xff]
    %v171 = vld [vmem:[#allocation7 + $0x128] sm:$0xff]
    %v172 = vld [vmem:[#allocation7 + $0x130] sm:$0xff]
    %v173 = vld [vmem:[#allocation7 + $0x138] sm:$0xff]
    %v174 = vld [vmem:[#allocation7 + $0x140] sm:$0xff]
    %v175 = vld [vmem:[#allocation7 + $0x148] sm:$0xff]
    %v176 = vld [vmem:[#allocation7 + $0x150] sm:$0xff]
    %v177 = vld [vmem:[#allocation7 + $0x158] sm:$0xff]
    %v178 = vld [vmem:[#allocation7 + $0x160] sm:$0xff]
    %v179 = vld [vmem:[#allocation7 + $0x168] sm:$0xff]
    %v180 = vld [vmem:[#allocation7 + $0x170] sm:$0xff]
    %v181 = vld [vmem:[#allocation7 + $0x178] sm:$0xff]
    %v182 = vld [vmem:[#allocation7 + $0x180] sm:$0xff]
    %v183 = vld [vmem:[#allocation7 + $0x188] sm:$0xff]
    %v184 = vld [vmem:[#allocation7 + $0x190] sm:$0xff]
    %v185 = vld [vmem:[#allocation7 + $0x198] sm:$0xff]
    %v186 = vld [vmem:[#allocation7 + $0x1a0] sm:$0xff]
    %v187 = vld [vmem:[#allocation7 + $0x1a8] sm:$0xff]
    %v188 = vld [vmem:[#allocation7 + $0x1b0] sm:$0xff]
    %v189 = vld [vmem:[#allocation7 + $0x1b8] sm:$0xff]
    %v190 = vld [vmem:[#allocation7 + $0x1c0] sm:$0xff]
    %v191 = vld [vmem:[#allocation7 + $0x1c8] sm:$0xff]
    %v192 = vld [vmem:[#allocation7 + $0x1d0] sm:$0xff]
    %v193 = vld [vmem:[#allocation7 + $0x1d8] sm:$0xff]
    %v194 = vld [vmem:[#allocation7 + $0x1e0] sm:$0xff]
    %v195 = vld [vmem:[#allocation7 + $0x1e8] sm:$0xff]
    %v196 = vld [vmem:[#allocation7 + $0x1f0] sm:$0xff]
    %v197 = vld [vmem:[#allocation7 + $0x1f8] sm:$0xff]
    %v198 = vunpack.c.l.bf16 %v134
    %v199 = vunpack.c.h.bf16 %v134
    %v200 = vunpack.c.l.bf16 %v135
    %v201 = vunpack.c.h.bf16 %v135
    %v202 = vunpack.c.l.bf16 %v136
    %v203 = vunpack.c.h.bf16 %v136
    %v204 = vunpack.c.l.bf16 %v137
    %v205 = vunpack.c.h.bf16 %v137
    %v206 = vunpack.c.l.bf16 %v138
    %v207 = vunpack.c.h.bf16 %v138
    %v208 = vunpack.c.l.bf16 %v139
    %v209 = vunpack.c.h.bf16 %v139
    %v210 = vunpack.c.l.bf16 %v140
    %v211 = vunpack.c.h.bf16 %v140
    %v212 = vunpack.c.l.bf16 %v141
    %v213 = vunpack.c.h.bf16 %v141
    %v214 = vunpack.c.l.bf16 %v142
    %v215 = vunpack.c.h.bf16 %v142
    %v216 = vunpack.c.l.bf16 %v143
    %v217 = vunpack.c.h.bf16 %v143
    %v218 = vunpack.c.l.bf16 %v144
    %v219 = vunpack.c.h.bf16 %v144
    %v220 = vunpack.c.l.bf16 %v145
    %v221 = vunpack.c.h.bf16 %v145
    %v222 = vunpack.c.l.bf16 %v146
    %v223 = vunpack.c.h.bf16 %v146
    %v224 = vunpack.c.l.bf16 %v147
    %v225 = vunpack.c.h.bf16 %v147
    %v226 = vunpack.c.l.bf16 %v148
    %v227 = vunpack.c.h.bf16 %v148
    %v228 = vunpack.c.l.bf16 %v149
    %v229 = vunpack.c.h.bf16 %v149
    %v230 = vunpack.c.l.bf16 %v150
    %v231 = vunpack.c.h.bf16 %v150
    %v232 = vunpack.c.l.bf16 %v151
    %v233 = vunpack.c.h.bf16 %v151
    %v234 = vunpack.c.l.bf16 %v152
    %v235 = vunpack.c.h.bf16 %v152
    %v236 = vunpack.c.l.bf16 %v153
    %v237 = vunpack.c.h.bf16 %v153
    %v238 = vunpack.c.l.bf16 %v154
    %v239 = vunpack.c.h.bf16 %v154
    %v240 = vunpack.c.l.bf16 %v155
    %v241 = vunpack.c.h.bf16 %v155
    %v242 = vunpack.c.l.bf16 %v156
    %v243 = vunpack.c.h.bf16 %v156
    %v244 = vunpack.c.l.bf16 %v157
    %v245 = vunpack.c.h.bf16 %v157
    %v246 = vunpack.c.l.bf16 %v158
    %v247 = vunpack.c.h.bf16 %v158
    %v248 = vunpack.c.l.bf16 %v159
    %v249 = vunpack.c.h.bf16 %v159
    %v250 = vunpack.c.l.bf16 %v160
    %v251 = vunpack.c.h.bf16 %v160
    %v252 = vunpack.c.l.bf16 %v161
    %v253 = vunpack.c.h.bf16 %v161
    %v254 = vunpack.c.l.bf16 %v162
    %v255 = vunpack.c.h.bf16 %v162
    %v256 = vunpack.c.l.bf16 %v163
    %v257 = vunpack.c.h.bf16 %v163
    %v258 = vunpack.c.l.bf16 %v164
    %v259 = vunpack.c.h.bf16 %v164
    %v260 = vunpack.c.l.bf16 %v165
    %v261 = vunpack.c.h.bf16 %v165
    %v262 = vunpack.c.l.bf16 %v166
    %v263 = vunpack.c.h.bf16 %v166
    %v264 = vunpack.c.l.bf16 %v167
    %v265 = vunpack.c.h.bf16 %v167
    %v266 = vunpack.c.l.bf16 %v168
    %v267 = vunpack.c.h.bf16 %v168
    %v268 = vunpack.c.l.bf16 %v169
    %v269 = vunpack.c.h.bf16 %v169
    %v270 = vunpack.c.l.bf16 %v170
    %v271 = vunpack.c.h.bf16 %v170
    %v272 = vunpack.c.l.bf16 %v171
    %v273 = vunpack.c.h.bf16 %v171
    %v274 = vunpack.c.l.bf16 %v172
    %v275 = vunpack.c.h.bf16 %v172
    %v276 = vunpack.c.l.bf16 %v173
    %v277 = vunpack.c.h.bf16 %v173
    %v278 = vunpack.c.l.bf16 %v174
    %v279 = vunpack.c.h.bf16 %v174
    %v280 = vunpack.c.l.bf16 %v175
    %v281 = vunpack.c.h.bf16 %v175
    %v282 = vunpack.c.l.bf16 %v176
    %v283 = vunpack.c.h.bf16 %v176
    %v284 = vunpack.c.l.bf16 %v177
    %v285 = vunpack.c.h.bf16 %v177
    %v286 = vunpack.c.l.bf16 %v178
    %v287 = vunpack.c.h.bf16 %v178
    %v288 = vunpack.c.l.bf16 %v179
    %v289 = vunpack.c.h.bf16 %v179
    %v290 = vunpack.c.l.bf16 %v180
    %v291 = vunpack.c.h.bf16 %v180
    %v292 = vunpack.c.l.bf16 %v181
    %v293 = vunpack.c.h.bf16 %v181
    %v294 = vunpack.c.l.bf16 %v182
    %v295 = vunpack.c.h.bf16 %v182
    %v296 = vunpack.c.l.bf16 %v183
    %v297 = vunpack.c.h.bf16 %v183
    %v298 = vunpack.c.l.bf16 %v184
    %v299 = vunpack.c.h.bf16 %v184
    %v300 = vunpack.c.l.bf16 %v185
    %v301 = vunpack.c.h.bf16 %v185
    %v302 = vunpack.c.l.bf16 %v186
    %v303 = vunpack.c.h.bf16 %v186
    %v304 = vunpack.c.l.bf16 %v187
    %v305 = vunpack.c.h.bf16 %v187
    %v306 = vunpack.c.l.bf16 %v188
    %v307 = vunpack.c.h.bf16 %v188
    %v308 = vunpack.c.l.bf16 %v189
    %v309 = vunpack.c.h.bf16 %v189
    %v310 = vunpack.c.l.bf16 %v190
    %v311 = vunpack.c.h.bf16 %v190
    %v312 = vunpack.c.l.bf16 %v191
    %v313 = vunpack.c.h.bf16 %v191
    %v314 = vunpack.c.l.bf16 %v192
    %v315 = vunpack.c.h.bf16 %v192
    %v316 = vunpack.c.l.bf16 %v193
    %v317 = vunpack.c.h.bf16 %v193
    %v318 = vunpack.c.l.bf16 %v194
    %v319 = vunpack.c.h.bf16 %v194
    %v320 = vunpack.c.l.bf16 %v195
    %v321 = vunpack.c.h.bf16 %v195
    %v322 = vunpack.c.l.bf16 %v196
    %v323 = vunpack.c.h.bf16 %v196
    %v324 = vunpack.c.l.bf16 %v197
    %v325 = vunpack.c.h.bf16 %v197
    %v326 = vld [vmem:[#allocation3] sm:$0xf]
    %328 = vst [vmem:[#allocation1] ss:$4 sm:$0xff] %v326
    %v329 = vld.sshfl [vmem:[#allocation1] sm:$0xff pattern:$0x73625140]
    %v330 = vld.sshfl [vmem:[#allocation1 + $0x8] sm:$0xff pattern:$0x73625140]
    %333 = vmatpush.msra.mxu0 %v258
    %334 = vmatpush.msra.mxu0 %v254
    %335 = vmatpush.msra.mxu0 %v250
    %336 = vmatpush.msra.mxu0 %v246
    %337 = vmatpush.msra.mxu0 %v242
    %338 = vmatpush.msra.mxu0 %v238
    %339 = vmatpush.msra.mxu0 %v234
    %340 = vmatpush.msra.mxu0 %v230
    %341 = vmatpush.msra.mxu0 %v226
    %342 = vmatpush.msra.mxu0 %v222
    %343 = vmatpush.msra.mxu0 %v218
    %344 = vmatpush.msra.mxu0 %v214
    %345 = vmatpush.msra.mxu0 %v210
    %346 = vmatpush.msra.mxu0 %v206
    %347 = vmatpush.msra.mxu0 %v202
    %348 = vmatpush.msra.mxu0 %v198
    %349 = vmatmul.f32.gmra.mxu0 %v329
    %v350 = vpop.f32.mrf.mxu0
    %v351 = vadd.f32 0.0, %v350
    %352 = vdwg.mxu0
    %353 = vmatpush.msra.mxu0 %v322
    %354 = vmatpush.msra.mxu0 %v318
    %355 = vmatpush.msra.mxu0 %v314
    %356 = vmatpush.msra.mxu0 %v310
    %357 = vmatpush.msra.mxu0 %v306
    %358 = vmatpush.msra.mxu0 %v302
    %359 = vmatpush.msra.mxu0 %v298
    %360 = vmatpush.msra.mxu0 %v294
    %361 = vmatpush.msra.mxu0 %v290
    %362 = vmatpush.msra.mxu0 %v286
    %363 = vmatpush.msra.mxu0 %v282
    %364 = vmatpush.msra.mxu0 %v278
    %365 = vmatpush.msra.mxu0 %v274
    %366 = vmatpush.msra.mxu0 %v270
    %367 = vmatpush.msra.mxu0 %v266
    %368 = vmatpush.msra.mxu0 %v262
    %369 = vmatmul.f32.gmra.mxu0 %v330
    %v370 = vpop.f32.mrf.mxu0
    %v371 = vadd.f32 %v351, %v370
    %372 = vdwg.mxu0
    %373 = vmatpush.msra.mxu0 %v259
    %374 = vmatpush.msra.mxu0 %v255
    %375 = vmatpush.msra.mxu0 %v251
    %376 = vmatpush.msra.mxu0 %v247
    %377 = vmatpush.msra.mxu0 %v243
    %378 = vmatpush.msra.mxu0 %v239
    %379 = vmatpush.msra.mxu0 %v235
    %380 = vmatpush.msra.mxu0 %v231
    %381 = vmatpush.msra.mxu0 %v227
    %382 = vmatpush.msra.mxu0 %v223
    %383 = vmatpush.msra.mxu0 %v219
    %384 = vmatpush.msra.mxu0 %v215
    %385 = vmatpush.msra.mxu0 %v211
    %386 = vmatpush.msra.mxu0 %v207
    %387 = vmatpush.msra.mxu0 %v203
    %388 = vmatpush.msra.mxu0 %v199
    %389 = vmatmul.f32.gmra.mxu0 %v329
    %v390 = vpop.f32.mrf.mxu0
    %v391 = vadd.f32 0.0, %v390
    %392 = vdwg.mxu0
    %393 = vmatpush.msra.mxu0 %v323
    %394 = vmatpush.msra.mxu0 %v319
    %395 = vmatpush.msra.mxu0 %v315
    %396 = vmatpush.msra.mxu0 %v311
    %397 = vmatpush.msra.mxu0 %v307
    %398 = vmatpush.msra.mxu0 %v303
    %399 = vmatpush.msra.mxu0 %v299
    %400 = vmatpush.msra.mxu0 %v295
    %401 = vmatpush.msra.mxu0 %v291
    %402 = vmatpush.msra.mxu0 %v287
    %403 = vmatpush.msra.mxu0 %v283
    %404 = vmatpush.msra.mxu0 %v279
    %405 = vmatpush.msra.mxu0 %v275
    %406 = vmatpush.msra.mxu0 %v271
    %407 = vmatpush.msra.mxu0 %v267
    %408 = vmatpush.msra.mxu0 %v263
    %409 = vmatmul.f32.gmra.mxu0 %v330
    %v410 = vpop.f32.mrf.mxu0
    %v411 = vadd.f32 %v391, %v410
    %412 = vdwg.mxu0
    %413 = vmatpush.msra.mxu0 %v260
    %414 = vmatpush.msra.mxu0 %v256
    %415 = vmatpush.msra.mxu0 %v252
    %416 = vmatpush.msra.mxu0 %v248
    %417 = vmatpush.msra.mxu0 %v244
    %418 = vmatpush.msra.mxu0 %v240
    %419 = vmatpush.msra.mxu0 %v236
    %420 = vmatpush.msra.mxu0 %v232
    %421 = vmatpush.msra.mxu0 %v228
    %422 = vmatpush.msra.mxu0 %v224
    %423 = vmatpush.msra.mxu0 %v220
    %424 = vmatpush.msra.mxu0 %v216
    %425 = vmatpush.msra.mxu0 %v212
    %426 = vmatpush.msra.mxu0 %v208
    %427 = vmatpush.msra.mxu0 %v204
    %428 = vmatpush.msra.mxu0 %v200
    %429 = vmatmul.f32.gmra.mxu0 %v329
    %v430 = vpop.f32.mrf.mxu0
    %v431 = vadd.f32 0.0, %v430
    %432 = vdwg.mxu0
    %433 = vmatpush.msra.mxu0 %v324
    %434 = vmatpush.msra.mxu0 %v320
    %435 = vmatpush.msra.mxu0 %v316
    %436 = vmatpush.msra.mxu0 %v312
    %437 = vmatpush.msra.mxu0 %v308
    %438 = vmatpush.msra.mxu0 %v304
    %439 = vmatpush.msra.mxu0 %v300
    %440 = vmatpush.msra.mxu0 %v296
    %441 = vmatpush.msra.mxu0 %v292
    %442 = vmatpush.msra.mxu0 %v288
    %443 = vmatpush.msra.mxu0 %v284
    %444 = vmatpush.msra.mxu0 %v280
    %445 = vmatpush.msra.mxu0 %v276
    %446 = vmatpush.msra.mxu0 %v272
    %447 = vmatpush.msra.mxu0 %v268
    %448 = vmatpush.msra.mxu0 %v264
    %449 = vmatmul.f32.gmra.mxu0 %v330
    %v450 = vpop.f32.mrf.mxu0
    %v451 = vadd.f32 %v431, %v450
    %452 = vdwg.mxu0
    %453 = vmatpush.msra.mxu0 %v261
    %454 = vmatpush.msra.mxu0 %v257
    %455 = vmatpush.msra.mxu0 %v253
    %456 = vmatpush.msra.mxu0 %v249
    %457 = vmatpush.msra.mxu0 %v245
    %458 = vmatpush.msra.mxu0 %v241
    %459 = vmatpush.msra.mxu0 %v237
    %460 = vmatpush.msra.mxu0 %v233
    %461 = vmatpush.msra.mxu0 %v229
    %462 = vmatpush.msra.mxu0 %v225
    %463 = vmatpush.msra.mxu0 %v221
    %464 = vmatpush.msra.mxu0 %v217
    %465 = vmatpush.msra.mxu0 %v213
    %466 = vmatpush.msra.mxu0 %v209
    %467 = vmatpush.msra.mxu0 %v205
    %468 = vmatpush.msra.mxu0 %v201
    %469 = vmatmul.f32.gmra.mxu0 %v329
    %v470 = vpop.f32.mrf.mxu0
    %v471 = vadd.f32 0.0, %v470
    %472 = vdwg.mxu0
    %473 = vmatpush.msra.mxu0 %v325
    %474 = vmatpush.msra.mxu0 %v321
    %475 = vmatpush.msra.mxu0 %v317
    %476 = vmatpush.msra.mxu0 %v313
    %477 = vmatpush.msra.mxu0 %v309
    %478 = vmatpush.msra.mxu0 %v305
    %479 = vmatpush.msra.mxu0 %v301
    %480 = vmatpush.msra.mxu0 %v297
    %481 = vmatpush.msra.mxu0 %v293
    %482 = vmatpush.msra.mxu0 %v289
    %483 = vmatpush.msra.mxu0 %v285
    %484 = vmatpush.msra.mxu0 %v281
    %485 = vmatpush.msra.mxu0 %v277
    %486 = vmatpush.msra.mxu0 %v273
    %487 = vmatpush.msra.mxu0 %v269
    %488 = vmatpush.msra.mxu0 %v265
    %489 = vmatmul.f32.gmra.mxu0 %v330
    %v490 = vpop.f32.mrf.mxu0
    %v491 = vadd.f32 %v471, %v490
    %492 = vdwg.mxu0
    %v493 = vld [vmem:[#allocation5] sm:$0xf]
    %495 = vst [vmem:[#allocation1] ss:$4 sm:$0xff] %v493
    %v496 = vld.sshfl [vmem:[#allocation1] sm:$0xff pattern:$0x73625140]
    %v497 = vld.sshfl [vmem:[#allocation1 + $0x8] sm:$0xff pattern:$0x73625140]
    %500 = vmatpush.msra.mxu0 %v258
    %501 = vmatpush.msra.mxu0 %v254
    %502 = vmatpush.msra.mxu0 %v250
    %503 = vmatpush.msra.mxu0 %v246
    %504 = vmatpush.msra.mxu0 %v242
    %505 = vmatpush.msra.mxu0 %v238
    %506 = vmatpush.msra.mxu0 %v234
    %507 = vmatpush.msra.mxu0 %v230
    %508 = vmatpush.msra.mxu0 %v226
    %509 = vmatpush.msra.mxu0 %v222
    %510 = vmatpush.msra.mxu0 %v218
    %511 = vmatpush.msra.mxu0 %v214
    %512 = vmatpush.msra.mxu0 %v210
    %513 = vmatpush.msra.mxu0 %v206
    %514 = vmatpush.msra.mxu0 %v202
    %515 = vmatpush.msra.mxu0 %v198
    %516 = vmatmul.f32.gmra.mxu0 %v496
    %v517 = vpop.f32.mrf.mxu0
    %v518 = vadd.f32 0.0, %v517
    %519 = vdwg.mxu0
    %520 = vmatpush.msra.mxu0 %v322
    %521 = vmatpush.msra.mxu0 %v318
    %522 = vmatpush.msra.mxu0 %v314
    %523 = vmatpush.msra.mxu0 %v310
    %524 = vmatpush.msra.mxu0 %v306
    %525 = vmatpush.msra.mxu0 %v302
    %526 = vmatpush.msra.mxu0 %v298
    %527 = vmatpush.msra.mxu0 %v294
    %528 = vmatpush.msra.mxu0 %v290
    %529 = vmatpush.msra.mxu0 %v286
    %530 = vmatpush.msra.mxu0 %v282
    %531 = vmatpush.msra.mxu0 %v278
    %532 = vmatpush.msra.mxu0 %v274
    %533 = vmatpush.msra.mxu0 %v270
    %534 = vmatpush.msra.mxu0 %v266
    %535 = vmatpush.msra.mxu0 %v262
    %536 = vmatmul.f32.gmra.mxu0 %v497
    %v537 = vpop.f32.mrf.mxu0
    %v538 = vadd.f32 %v518, %v537
    %539 = vdwg.mxu0
    %540 = vmatpush.msra.mxu0 %v259
    %541 = vmatpush.msra.mxu0 %v255
    %542 = vmatpush.msra.mxu0 %v251
    %543 = vmatpush.msra.mxu0 %v247
    %544 = vmatpush.msra.mxu0 %v243
    %545 = vmatpush.msra.mxu0 %v239
    %546 = vmatpush.msra.mxu0 %v235
    %547 = vmatpush.msra.mxu0 %v231
    %548 = vmatpush.msra.mxu0 %v227
    %549 = vmatpush.msra.mxu0 %v223
    %550 = vmatpush.msra.mxu0 %v219
    %551 = vmatpush.msra.mxu0 %v215
    %552 = vmatpush.msra.mxu0 %v211
    %553 = vmatpush.msra.mxu0 %v207
    %554 = vmatpush.msra.mxu0 %v203
    %555 = vmatpush.msra.mxu0 %v199
    %556 = vmatmul.f32.gmra.mxu0 %v496
    %v557 = vpop.f32.mrf.mxu0
    %v558 = vadd.f32 0.0, %v557
    %559 = vdwg.mxu0
    %560 = vmatpush.msra.mxu0 %v323
    %561 = vmatpush.msra.mxu0 %v319
    %562 = vmatpush.msra.mxu0 %v315
    %563 = vmatpush.msra.mxu0 %v311
    %564 = vmatpush.msra.mxu0 %v307
    %565 = vmatpush.msra.mxu0 %v303
    %566 = vmatpush.msra.mxu0 %v299
    %567 = vmatpush.msra.mxu0 %v295
    %568 = vmatpush.msra.mxu0 %v291
    %569 = vmatpush.msra.mxu0 %v287
    %570 = vmatpush.msra.mxu0 %v283
    %571 = vmatpush.msra.mxu0 %v279
    %572 = vmatpush.msra.mxu0 %v275
    %573 = vmatpush.msra.mxu0 %v271
    %574 = vmatpush.msra.mxu0 %v267
    %575 = vmatpush.msra.mxu0 %v263
    %576 = vmatmul.f32.gmra.mxu0 %v497
    %v577 = vpop.f32.mrf.mxu0
    %v578 = vadd.f32 %v558, %v577
    %579 = vdwg.mxu0
    %580 = vmatpush.msra.mxu0 %v260
    %581 = vmatpush.msra.mxu0 %v256
    %582 = vmatpush.msra.mxu0 %v252
    %583 = vmatpush.msra.mxu0 %v248
    %584 = vmatpush.msra.mxu0 %v244
    %585 = vmatpush.msra.mxu0 %v240
    %586 = vmatpush.msra.mxu0 %v236
    %587 = vmatpush.msra.mxu0 %v232
    %588 = vmatpush.msra.mxu0 %v228
    %589 = vmatpush.msra.mxu0 %v224
    %590 = vmatpush.msra.mxu0 %v220
    %591 = vmatpush.msra.mxu0 %v216
    %592 = vmatpush.msra.mxu0 %v212
    %593 = vmatpush.msra.mxu0 %v208
    %594 = vmatpush.msra.mxu0 %v204
    %595 = vmatpush.msra.mxu0 %v200
    %596 = vmatmul.f32.gmra.mxu0 %v496
    %v597 = vpop.f32.mrf.mxu0
    %v598 = vadd.f32 0.0, %v597
    %599 = vdwg.mxu0
    %600 = vmatpush.msra.mxu0 %v324
    %601 = vmatpush.msra.mxu0 %v320
    %602 = vmatpush.msra.mxu0 %v316
    %603 = vmatpush.msra.mxu0 %v312
    %604 = vmatpush.msra.mxu0 %v308
    %605 = vmatpush.msra.mxu0 %v304
    %606 = vmatpush.msra.mxu0 %v300
    %607 = vmatpush.msra.mxu0 %v296
    %608 = vmatpush.msra.mxu0 %v292
    %609 = vmatpush.msra.mxu0 %v288
    %610 = vmatpush.msra.mxu0 %v284
    %611 = vmatpush.msra.mxu0 %v280
    %612 = vmatpush.msra.mxu0 %v276
    %613 = vmatpush.msra.mxu0 %v272
    %614 = vmatpush.msra.mxu0 %v268
    %615 = vmatpush.msra.mxu0 %v264
    %616 = vmatmul.f32.gmra.mxu0 %v497
    %v617 = vpop.f32.mrf.mxu0
    %v618 = vadd.f32 %v598, %v617
    %619 = vdwg.mxu0
    %620 = vmatpush.msra.mxu0 %v261
    %621 = vmatpush.msra.mxu0 %v257
    %622 = vmatpush.msra.mxu0 %v253
    %623 = vmatpush.msra.mxu0 %v249
    %624 = vmatpush.msra.mxu0 %v245
    %625 = vmatpush.msra.mxu0 %v241
    %626 = vmatpush.msra.mxu0 %v237
    %627 = vmatpush.msra.mxu0 %v233
    %628 = vmatpush.msra.mxu0 %v229
    %629 = vmatpush.msra.mxu0 %v225
    %630 = vmatpush.msra.mxu0 %v221
    %631 = vmatpush.msra.mxu0 %v217
    %632 = vmatpush.msra.mxu0 %v213
    %633 = vmatpush.msra.mxu0 %v209
    %634 = vmatpush.msra.mxu0 %v205
    %635 = vmatpush.msra.mxu0 %v201
    %636 = vmatmul.f32.gmra.mxu0 %v496
    %v637 = vpop.f32.mrf.mxu0
    %v638 = vadd.f32 0.0, %v637
    %639 = vdwg.mxu0
    %640 = vmatpush.msra.mxu0 %v325
    %641 = vmatpush.msra.mxu0 %v321
    %642 = vmatpush.msra.mxu0 %v317
    %643 = vmatpush.msra.mxu0 %v313
    %644 = vmatpush.msra.mxu0 %v309
    %645 = vmatpush.msra.mxu0 %v305
    %646 = vmatpush.msra.mxu0 %v301
    %647 = vmatpush.msra.mxu0 %v297
    %648 = vmatpush.msra.mxu0 %v293
    %649 = vmatpush.msra.mxu0 %v289
    %650 = vmatpush.msra.mxu0 %v285
    %651 = vmatpush.msra.mxu0 %v281
    %652 = vmatpush.msra.mxu0 %v277
    %653 = vmatpush.msra.mxu0 %v273
    %654 = vmatpush.msra.mxu0 %v269
    %655 = vmatpush.msra.mxu0 %v265
    %656 = vmatmul.f32.gmra.mxu0 %v497
    %v657 = vpop.f32.mrf.mxu0
    %v658 = vadd.f32 %v638, %v657
    %659 = vdwg.mxu0
    %v660 = vld [vmem:[#allocation8] sm:$0xf]
    %v662 = vperm.slane %v660, 0
    %v663 = vperm.slane %v660, 1
    %v664 = vperm.slane %v660, 2
    %v665 = vperm.slane %v660, 3
    %v670 = vmul.f32 %v371, %v662
    %v671 = vmul.f32 %v411, %v663
    %v672 = vmul.f32 %v451, %v664
    %v673 = vmul.f32 %v491, %v665
    %v674 = vsub.f32 1.0, %v670
    %v675 = vsub.f32 1.0, %v671
    %v676 = vsub.f32 1.0, %v672
    %v677 = vsub.f32 1.0, %v673
    %vm678 = vcmp.lt.f32.partialorder %v674, 0.0
    %vm679 = vcmp.lt.f32.partialorder %v675, 0.0
    %vm680 = vcmp.lt.f32.partialorder %v676, 0.0
    %vm681 = vcmp.lt.f32.partialorder %v677, 0.0
    %v682 = vsel %vm678, -1.0, %v674
    %v683 = vsel %vm679, -1.0, %v675
    %v684 = vsel %vm680, -1.0, %v676
    %v685 = vsel %vm681, -1.0, %v677
    %v686 = vld [vmem:[#allocation10] sm:$0xf]
    %v688 = vperm.slane %v686, 0
    %v689 = vperm.slane %v686, 1
    %v690 = vperm.slane %v686, 2
    %v691 = vperm.slane %v686, 3
    %v696 = vrcp.pop %v682
    %v697 = vmul.f32 %v682, %v696
    %v698 = vsub.f32 1.0, %v697
    %v699 = vmul.f32 %v696, %v698
    %v700 = vadd.f32 %v696, %v699
    %vm701 = vweird.f32 %v682
    %vm702 = vweird.f32 %v696
    %vm703 = vmor %vm701, %vm702
    %v704 = vsel %vm703, %v696, %v700
    %v705 = vand.u32 2147483647, %v682
    %vm706 = vcmp.eq.f32.partialorder %v705, 8.507059e+37
    %v707 = vand.u32 %v682, 2147483648
    %v708 = vor.u32 1.1754944e-38, %v707
    %v709 = vsel %vm706, %v708, %v704
    %v710 = vmul.f32 %v688, %v709
    %v711 = vrcp.pop %v683
    %v712 = vmul.f32 %v683, %v711
    %v713 = vsub.f32 1.0, %v712
    %v714 = vmul.f32 %v711, %v713
    %v715 = vadd.f32 %v711, %v714
    %vm716 = vweird.f32 %v683
    %vm717 = vweird.f32 %v711
    %vm718 = vmor %vm716, %vm717
    %v719 = vsel %vm718, %v711, %v715
    %v720 = vand.u32 2147483647, %v683
    %vm721 = vcmp.eq.f32.partialorder %v720, 8.507059e+37
    %v722 = vand.u32 %v683, 2147483648
    %v723 = vor.u32 1.1754944e-38, %v722
    %v724 = vsel %vm721, %v723, %v719
    %v725 = vmul.f32 %v689, %v724
    %v726 = vrcp.pop %v684
    %v727 = vmul.f32 %v684, %v726
    %v728 = vsub.f32 1.0, %v727
    %v729 = vmul.f32 %v726, %v728
    %v730 = vadd.f32 %v726, %v729
    %vm731 = vweird.f32 %v684
    %vm732 = vweird.f32 %v726
    %vm733 = vmor %vm731, %vm732
    %v734 = vsel %vm733, %v726, %v730
    %v735 = vand.u32 2147483647, %v684
    %vm736 = vcmp.eq.f32.partialorder %v735, 8.507059e+37
    %v737 = vand.u32 %v684, 2147483648
    %v738 = vor.u32 1.1754944e-38, %v737
    %v739 = vsel %vm736, %v738, %v734
    %v740 = vmul.f32 %v690, %v739
    %v741 = vrcp.pop %v685
    %v742 = vmul.f32 %v685, %v741
    %v743 = vsub.f32 1.0, %v742
    %v744 = vmul.f32 %v741, %v743
    %v745 = vadd.f32 %v741, %v744
    %vm746 = vweird.f32 %v685
    %vm747 = vweird.f32 %v741
    %vm748 = vmor %vm746, %vm747
    %v749 = vsel %vm748, %v741, %v745
    %v750 = vand.u32 2147483647, %v685
    %vm751 = vcmp.eq.f32.partialorder %v750, 8.507059e+37
    %v752 = vand.u32 %v685, 2147483648
    %v753 = vor.u32 1.1754944e-38, %v752
    %v754 = vsel %vm751, %v753, %v749
    %v755 = vmul.f32 %v691, %v754
    %vm756 = vcmp.lt.f32.partialorder %v710, 0.0
    %vm757 = vcmp.lt.f32.partialorder %v725, 0.0
    %vm758 = vcmp.lt.f32.partialorder %v740, 0.0
    %vm759 = vcmp.lt.f32.partialorder %v755, 0.0
    %v760 = vsel %vm756, 1000.0, %v710
    %v761 = vsel %vm757, 1000.0, %v725
    %v762 = vsel %vm758, 1000.0, %v740
    %v763 = vsel %vm759, 1000.0, %v755
    %v764 = vld [vmem:[%s125] sm:$0xf]
    %v766 = vperm.slane %v764, 0
    %v767 = vperm.slane %v764, 1
    %v768 = vperm.slane %v764, 2
    %v769 = vperm.slane %v764, 3
    %v774 = vadd.f32 %v760, %v766
    %v775 = vadd.f32 %v761, %v767
    %v776 = vadd.f32 %v762, %v768
    %v777 = vadd.f32 %v763, %v769
    %vm778 = vcmp.gt.f32.partialorder %v538, 0.0
    %vm779 = vcmp.gt.f32.partialorder %v578, 0.0
    %vm780 = vcmp.gt.f32.partialorder %v618, 0.0
    %vm781 = vcmp.gt.f32.partialorder %v658, 0.0
    %v782 = vmul.f32 %v774, %v538
    %v783 = vmul.f32 %v775, %v578
    %v784 = vmul.f32 %v776, %v618
    %v785 = vmul.f32 %v777, %v658
    %v786 = vsel %vm778, %v782, 0.0
    %v787 = vsel %vm779, %v783, 0.0
    %v788 = vsel %vm780, %v784, 0.0
    %v789 = vsel %vm781, %v785, 0.0
    %v790 = vld [vmem:[#allocation2] sm:$0x3]
    %vm791 = vcmask 1041408
    %v792 = vsel %vm791, %v786, 0.0
    %v793 = vsel %vm791, %v787, 0.0
    %v794 = vadd.f32 %v792, %v793
    %v795 = vsel %vm791, %v788, 0.0
    %v796 = vadd.f32 %v794, %v795
    %v797 = vsel %vm791, %v789, 0.0
    %v798 = vadd.f32 %v796, %v797
    %799 = vadd.xlane.f32.xlu0 %v798
    %v800 = vpop.xlane.xlu0 %799
    %v801 = vadd.f32 %v790, %v800
    %vm802 = vcmask 1024
    %803 = vst.msk [vmem:[#allocation2] sm:$0x3] %vm802, %v801
    // Predicated region
    $region50: #{tpu_custom_call.1} parent=1 // pred_check
      %p804 = pneg %p128
    $region51: #{tpu_custom_call.1} parent=1 // pred_check_branch
      %806 = sbr.rel (%p804) target = $region53
    $region52: #{tpu_custom_call.1} parent=1 // pred_region
      %v807 = vld [vmem:[#allocation2] sm:$0x3]
      %808 = vst.msk [vmem:[%s6] sm:$0x3] %vm802, %v807
    $region53: #{tpu_custom_call.1} parent=1 // pred_fallthru
      _
    // Predicated region
    $region54: #{tpu_custom_call.1} parent=1 // pred_check
      _
    $region55: #{tpu_custom_call.1} parent=1 // pred_check_branch
      %810 = sbr.rel (0) target = $region57
    $region56: #{tpu_custom_call.1} parent=1 // pred_region
      _
    $region57: #{tpu_custom_call.1} parent=1 // pred_fallthru
      _
    // Predicated region
    $region58: #{tpu_custom_call.1} parent=1 // pred_check
      _
    $region59: #{tpu_custom_call.1} parent=1 // pred_check_branch
      %812 = sbr.rel (0) target = $region61
    $region60: #{tpu_custom_call.1} parent=1 // pred_region
      _
    $region61: #{tpu_custom_call.1} parent=1 // pred_fallthru
      _
    %813 = vsyncpa [#allocation4], 1
    %814 = vsyncpa [#allocation6], 1
    %815 = vsyncpa [#allocation9], 1

</llo_original>
